<compile_context>
chip_gen: v7x
topology: tpu7x:2x2x1
jax: 0.10.0
libtpu: 0.0.40
codegen_flags: <defaults>
</compile_context>

<pallas_src>
import functools

import jax
import jax.numpy as jnp
from jax.experimental import pallas as pl
from jax.experimental.pallas import tpu as pltpu

_OUT_LANES = 128  # lane-dense per-step partial (avoids masked vst.msk stores)


def _pairwise_kernel(s_ref, t_ref, out_ref, *, kh, kw, n_h, n_w, h, w, bt):
    """s_ref/t_ref: (bt, C, H*W) blocks; out_ref: (1, 128) per-step partial."""
    m = n_h * n_w

    def gram(x_ref, b):
        cols = []
        for ih in range(n_h):
            h0, h1 = ih * kh, min((ih + 1) * kh, h)
            # Row-band running max: each element is loaded once; rows are
            # lane-dense (C, W) slices of the flattened-spatial ref.  Upcast at
            # load time (max commutes with the upcast; VPU has plenty of slack).
            band = x_ref[b, :, h0 * w:(h0 + 1) * w].astype(jnp.float32)
            for hh in range(h0 + 1, h1):
                row = x_ref[b, :, hh * w:(hh + 1) * w].astype(jnp.float32)
                band = jnp.maximum(band, row)
            for iw in range(n_w):
                w0, w1 = iw * kw, min((iw + 1) * kw, w)
                # MaxPool2d(ceil_mode=True): ragged last windows via static
                # slices of the already-loaded band value.
                cols.append(jnp.max(band[:, w0:w1], axis=1, keepdims=True))
        feat = jnp.concatenate(cols, axis=1)                       # (C, M)
        # Channel L2 per spatial position, + 1e-8 after the sqrt (matches L2).
        ss = jnp.sum(feat * feat, axis=0, keepdims=True)           # (1, M)
        feat = feat / (jnp.sqrt(ss) + 1e-8)
        # einsum('cm,cn->mn') for tiny M (<= 9): built as M lane-broadcast
        # multiplies + channel reductions (VPU/XLU slack; DMA-bound kernel).
        rows = [jnp.sum(feat * feat[:, n:n + 1], axis=0, keepdims=True)
                for n in range(m)]
        return jnp.concatenate(rows, axis=0)                       # (M, M)

    total = jnp.zeros((1, 1), jnp.float32)
    for b in range(bt):  # static unroll; bt is capped small by the wrapper
        diff = gram(t_ref, b) - gram(s_ref, b)
        total = total + jnp.sum(diff * diff, keepdims=True)        # (1, 1)
    out_ref[...] = jnp.broadcast_to(total, out_ref.shape)


def _vmem_cap_bytes():
    """Physical VMEM with headroom: ~64 MiB on v7x, ~104 MiB on 128-MiB parts."""
    try:
        cap = int(pltpu.get_tpu_info().vmem_capacity_bytes)
    except Exception:
        cap = 64 << 20
    if cap > (64 << 20):
        cap -= 24 << 20
    return cap


def _pick_bt(batch, per_item_bytes, vmem_cap):
    """Items per grid step: ~1 MiB DMAs, >=2 steps when B>=2, fits VMEM."""
    target = 1 << 20
    bt = max(1, target // max(per_item_bytes, 1))
    # 2 inputs x 2 pipeline buffers must fit in roughly half the VMEM budget.
    bt = min(bt, max(1, (vmem_cap // 2) // max(4 * per_item_bytes, 1)))
    if batch >= 2:
        bt = min(bt, batch // 2)   # keep both TensorCores busy (v7x megacore)
    bt = max(1, min(bt, batch, 8))  # cap the static per-step unroll
    while batch % bt:
        bt -= 1
    return bt


def pairwise_loss(preds_s, preds_t, *, scale=0.5, cast_to_bf16=True):
    """CriterionPairWiseforWholeFeatAfterPool.forward on NCHW inputs."""
    assert preds_s.shape == preds_t.shape
    B, C, H, W = preds_t.shape
    kh, kw = int(H * scale), int(W * scale)   # torch's (patch_w, patch_h)
    assert kh > 0 and kw > 0, "spatial dims too small for the pooling scale"
    n_h, n_w = -(-H // kh), -(-W // kw)       # ceil_mode=True window counts
    m = n_h * n_w

    # bf16 feed halves HBM read bytes for this bandwidth-bound loss; pooling is
    # exact since max commutes with the upcast (the convert fuses upstream in a
    # real pipeline).
    if cast_to_bf16 and preds_s.dtype == jnp.float32:
        preds_s = preds_s.astype(jnp.bfloat16)
        preds_t = preds_t.astype(jnp.bfloat16)

    # Free contiguous reshape (no HBM traffic) — replaces the old materialized
    # NCHW->NHWC transpose.  Channels -> sublanes, flattened spatial -> lanes.
    s2 = preds_s.reshape(B, C, H * W)
    t2 = preds_t.reshape(B, C, H * W)

    itemsize = jnp.dtype(preds_s.dtype).itemsize
    per_item = C * H * W * itemsize
    vmem_cap = _vmem_cap_bytes()
    bt = _pick_bt(B, per_item, vmem_cap)
    num_blocks = B // bt

    # 2 inputs x 2 pipeline buffers per step, plus margin for temporaries.
    vmem_limit = int(min(max(4 * bt * per_item + (8 << 20), 32 << 20), vmem_cap))

    kernel = functools.partial(
        _pairwise_kernel, kh=kh, kw=kw, n_h=n_h, n_w=n_w, h=H, w=W, bt=bt)

    out = pl.pallas_call(
        kernel,
        out_shape=jax.ShapeDtypeStruct((num_blocks, 1, _OUT_LANES), jnp.float32),
        grid=(num_blocks,),
        in_specs=[
            pl.BlockSpec((bt, C, H * W), lambda i: (i, 0, 0)),
            pl.BlockSpec((bt, C, H * W), lambda i: (i, 0, 0)),
        ],
        out_specs=pl.BlockSpec((None, 1, _OUT_LANES), lambda i: (i, 0, 0)),
        compiler_params=pltpu.CompilerParams(
            dimension_semantics=("parallel",),
            vmem_limit_bytes=vmem_limit),
    )(s2, t2)

    # Source module sums over the batch (no /B); 1/M^2 scale hoisted here.
    return jnp.sum(out[:, 0, 0]) / float(m * m)


def _ref_loss(preds_s, preds_t, scale=0.5):
    """Pure-JAX mirror of the PyTorch module (including ceil_mode pooling)."""
    B, C, H, W = preds_t.shape
    kh, kw = int(H * scale), int(W * scale)
    n_h, n_w = -(-H // kh), -(-W // kw)

    def pool(x):
        cols = []
        for ih in range(n_h):
            for iw in range(n_w):
                win = x[:, :, ih * kh:min((ih + 1) * kh, H),
                              iw * kw:min((iw + 1) * kw, W)]
                cols.append(win.max(axis=(2, 3)))
        return jnp.stack(cols, axis=-1).reshape(B, C, n_h, n_w)

    def sim(f):
        f = f.astype(jnp.float32)
        l2 = jnp.sqrt((f ** 2).sum(axis=1, keepdims=True)) + 1e-8
        f = f / l2
        f = f.reshape(B, C, -1)
        return jnp.einsum('icm,icn->imn', f, f,
                          precision=jax.lax.Precision.HIGHEST)

    fs, ft = pool(preds_s), pool(preds_t)
    err = (sim(ft) - sim(fs)) ** 2 / float(ft.shape[-1] * ft.shape[-2]) ** 2
    return err.sum()


if __name__ == "__main__":
    key = jax.random.PRNGKey(0)
    k1, k2, k3, k4, k5, k6 = jax.random.split(key, 6)

    # Even spatial dims (common case).  The wrapper feeds the kernel bf16, so
    # the reference consumes the same bf16 values (pooling/upcast is exact).
    s1 = jax.random.normal(k1, (2, 4, 16, 16), dtype=jnp.float32)
    t1 = jax.random.normal(k2, (2, 4, 16, 16), dtype=jnp.float32)
    loss1 = pairwise_loss(s1, t1)
    jax.block_until_ready(loss1)
    ref1 = _ref_loss(s1.astype(jnp.bfloat16), t1.astype(jnp.bfloat16))
    assert jnp.allclose(loss1, ref1, atol=1e-4, rtol=1e-4), (loss1, ref1)

    # Odd spatial dims exercise the ceil_mode ragged last pooling windows.
    s2 = jax.random.normal(k3, (2, 8, 9, 7), dtype=jnp.float32)
    t2 = jax.random.normal(k4, (2, 8, 9, 7), dtype=jnp.float32)
    loss2 = pairwise_loss(s2, t2)
    jax.block_until_ready(loss2)
    ref2 = _ref_loss(s2.astype(jnp.bfloat16), t2.astype(jnp.bfloat16))
    assert jnp.allclose(loss2, ref2, atol=1e-4, rtol=1e-4), (loss2, ref2)

    # Larger batch exercises the multi-item (Bt=2) block / 2-step grid path.
    s3 = jax.random.normal(k5, (4, 4, 16, 16), dtype=jnp.float32)
    t3 = jax.random.normal(k6, (4, 4, 16, 16), dtype=jnp.float32)
    loss3 = pairwise_loss(s3, t3)
    jax.block_until_ready(loss3)
    ref3 = _ref_loss(s3.astype(jnp.bfloat16), t3.astype(jnp.bfloat16))
    assert jnp.allclose(loss3, ref3, atol=1e-4, rtol=1e-4), (loss3, ref3)

    print("KERNEL_OK")
</pallas_src>

<mosaic_0001>
module attributes {stable_mosaic.version = 11 : i64} {
  func.func @_pairwise_kernel(%arg0: i32, %arg1: memref<1x4x256xbf16, #tpu.memory_space<vmem>>, %arg2: memref<1x4x256xbf16, #tpu.memory_space<vmem>>, %arg3: memref<1x1x128xf32, #tpu.memory_space<vmem>>) attributes {dimension_semantics = [#tpu.dimension_semantics<parallel>], iteration_bounds = array<i64: 2>, scalar_prefetch = 0 : i64, scratch_operands = 0 : i64, tpu.core_type = #tpu.core_type<tc>, window_params = [{transform_indices = @transform_0, window_bounds = array<i64: 1, 4, 256>}, {transform_indices = @transform_1, window_bounds = array<i64: 1, 4, 256>}, {transform_indices = @transform_2, window_bounds = array<i64: 1, 1, 128>}]} {
    %cst = arith.constant 0.000000e+00 : f32
    %0 = vector.broadcast %cst : f32 to vector<1x1xf32>
    %c0 = arith.constant 0 : index
    %c0_0 = arith.constant 0 : index
    %c0_1 = arith.constant 0 : index
    %1 = vector.load %arg2[%c0, %c0_0, %c0_1] : memref<1x4x256xbf16, #tpu.memory_space<vmem>>, vector<1x4x16xbf16>
    %2 = vector.shape_cast %1 : vector<1x4x16xbf16> to vector<4x16xbf16>
    %3 = arith.extf %2 : vector<4x16xbf16> to vector<4x16xf32>
    %c0_2 = arith.constant 0 : index
    %c0_3 = arith.constant 0 : index
    %c16 = arith.constant 16 : index
    %4 = vector.load %arg2[%c0_2, %c0_3, %c16] : memref<1x4x256xbf16, #tpu.memory_space<vmem>>, vector<1x4x16xbf16>
    %5 = vector.shape_cast %4 : vector<1x4x16xbf16> to vector<4x16xbf16>
    %6 = arith.extf %5 : vector<4x16xbf16> to vector<4x16xf32>
    %7 = arith.maximumf %3, %6 : vector<4x16xf32>
    %c0_4 = arith.constant 0 : index
    %c0_5 = arith.constant 0 : index
    %c32 = arith.constant 32 : index
    %8 = vector.load %arg2[%c0_4, %c0_5, %c32] : memref<1x4x256xbf16, #tpu.memory_space<vmem>>, vector<1x4x16xbf16>
    %9 = vector.shape_cast %8 : vector<1x4x16xbf16> to vector<4x16xbf16>
    %10 = arith.extf %9 : vector<4x16xbf16> to vector<4x16xf32>
    %11 = arith.maximumf %7, %10 : vector<4x16xf32>
    %c0_6 = arith.constant 0 : index
    %c0_7 = arith.constant 0 : index
    %c48 = arith.constant 48 : index
    %12 = vector.load %arg2[%c0_6, %c0_7, %c48] : memref<1x4x256xbf16, #tpu.memory_space<vmem>>, vector<1x4x16xbf16>
    %13 = vector.shape_cast %12 : vector<1x4x16xbf16> to vector<4x16xbf16>
    %14 = arith.extf %13 : vector<4x16xbf16> to vector<4x16xf32>
    %15 = arith.maximumf %11, %14 : vector<4x16xf32>
    %c0_8 = arith.constant 0 : index
    %c0_9 = arith.constant 0 : index
    %c64 = arith.constant 64 : index
    %16 = vector.load %arg2[%c0_8, %c0_9, %c64] : memref<1x4x256xbf16, #tpu.memory_space<vmem>>, vector<1x4x16xbf16>
    %17 = vector.shape_cast %16 : vector<1x4x16xbf16> to vector<4x16xbf16>
    %18 = arith.extf %17 : vector<4x16xbf16> to vector<4x16xf32>
    %19 = arith.maximumf %15, %18 : vector<4x16xf32>
    %c0_10 = arith.constant 0 : index
    %c0_11 = arith.constant 0 : index
    %c80 = arith.constant 80 : index
    %20 = vector.load %arg2[%c0_10, %c0_11, %c80] : memref<1x4x256xbf16, #tpu.memory_space<vmem>>, vector<1x4x16xbf16>
    %21 = vector.shape_cast %20 : vector<1x4x16xbf16> to vector<4x16xbf16>
    %22 = arith.extf %21 : vector<4x16xbf16> to vector<4x16xf32>
    %23 = arith.maximumf %19, %22 : vector<4x16xf32>
    %c0_12 = arith.constant 0 : index
    %c0_13 = arith.constant 0 : index
    %c96 = arith.constant 96 : index
    %24 = vector.load %arg2[%c0_12, %c0_13, %c96] : memref<1x4x256xbf16, #tpu.memory_space<vmem>>, vector<1x4x16xbf16>
    %25 = vector.shape_cast %24 : vector<1x4x16xbf16> to vector<4x16xbf16>
    %26 = arith.extf %25 : vector<4x16xbf16> to vector<4x16xf32>
    %27 = arith.maximumf %23, %26 : vector<4x16xf32>
    %c0_14 = arith.constant 0 : index
    %c0_15 = arith.constant 0 : index
    %c112 = arith.constant 112 : index
    %28 = vector.load %arg2[%c0_14, %c0_15, %c112] : memref<1x4x256xbf16, #tpu.memory_space<vmem>>, vector<1x4x16xbf16>
    %29 = vector.shape_cast %28 : vector<1x4x16xbf16> to vector<4x16xbf16>
    %30 = arith.extf %29 : vector<4x16xbf16> to vector<4x16xf32>
    %31 = arith.maximumf %27, %30 : vector<4x16xf32>
    %32 = vector.extract_strided_slice %31 {offsets = [0, 0], sizes = [4, 8], strides = [1, 1]} : vector<4x16xf32> to vector<4x8xf32>
    %cst_16 = arith.constant dense<0xFF800000> : vector<4xf32>
    %33 = vector.multi_reduction <maximumf>, %32, %cst_16 [1] : vector<4x8xf32> to vector<4xf32>
    %34 = vector.shape_cast %33 : vector<4xf32> to vector<4x1xf32>
    %35 = vector.extract_strided_slice %31 {offsets = [0, 8], sizes = [4, 8], strides = [1, 1]} : vector<4x16xf32> to vector<4x8xf32>
    %cst_17 = arith.constant dense<0xFF800000> : vector<4xf32>
    %36 = vector.multi_reduction <maximumf>, %35, %cst_17 [1] : vector<4x8xf32> to vector<4xf32>
    %37 = vector.shape_cast %36 : vector<4xf32> to vector<4x1xf32>
    %c0_18 = arith.constant 0 : index
    %c0_19 = arith.constant 0 : index
    %c128 = arith.constant 128 : index
    %38 = vector.load %arg2[%c0_18, %c0_19, %c128] : memref<1x4x256xbf16, #tpu.memory_space<vmem>>, vector<1x4x16xbf16>
    %39 = vector.shape_cast %38 : vector<1x4x16xbf16> to vector<4x16xbf16>
    %40 = arith.extf %39 : vector<4x16xbf16> to vector<4x16xf32>
    %c0_20 = arith.constant 0 : index
    %c0_21 = arith.constant 0 : index
    %c144 = arith.constant 144 : index
    %41 = vector.load %arg2[%c0_20, %c0_21, %c144] : memref<1x4x256xbf16, #tpu.memory_space<vmem>>, vector<1x4x16xbf16>
    %42 = vector.shape_cast %41 : vector<1x4x16xbf16> to vector<4x16xbf16>
    %43 = arith.extf %42 : vector<4x16xbf16> to vector<4x16xf32>
    %44 = arith.maximumf %40, %43 : vector<4x16xf32>
    %c0_22 = arith.constant 0 : index
    %c0_23 = arith.constant 0 : index
    %c160 = arith.constant 160 : index
    %45 = vector.load %arg2[%c0_22, %c0_23, %c160] : memref<1x4x256xbf16, #tpu.memory_space<vmem>>, vector<1x4x16xbf16>
    %46 = vector.shape_cast %45 : vector<1x4x16xbf16> to vector<4x16xbf16>
    %47 = arith.extf %46 : vector<4x16xbf16> to vector<4x16xf32>
    %48 = arith.maximumf %44, %47 : vector<4x16xf32>
    %c0_24 = arith.constant 0 : index
    %c0_25 = arith.constant 0 : index
    %c176 = arith.constant 176 : index
    %49 = vector.load %arg2[%c0_24, %c0_25, %c176] : memref<1x4x256xbf16, #tpu.memory_space<vmem>>, vector<1x4x16xbf16>
    %50 = vector.shape_cast %49 : vector<1x4x16xbf16> to vector<4x16xbf16>
    %51 = arith.extf %50 : vector<4x16xbf16> to vector<4x16xf32>
    %52 = arith.maximumf %48, %51 : vector<4x16xf32>
    %c0_26 = arith.constant 0 : index
    %c0_27 = arith.constant 0 : index
    %c192 = arith.constant 192 : index
    %53 = vector.load %arg2[%c0_26, %c0_27, %c192] : memref<1x4x256xbf16, #tpu.memory_space<vmem>>, vector<1x4x16xbf16>
    %54 = vector.shape_cast %53 : vector<1x4x16xbf16> to vector<4x16xbf16>
    %55 = arith.extf %54 : vector<4x16xbf16> to vector<4x16xf32>
    %56 = arith.maximumf %52, %55 : vector<4x16xf32>
    %c0_28 = arith.constant 0 : index
    %c0_29 = arith.constant 0 : index
    %c208 = arith.constant 208 : index
    %57 = vector.load %arg2[%c0_28, %c0_29, %c208] : memref<1x4x256xbf16, #tpu.memory_space<vmem>>, vector<1x4x16xbf16>
    %58 = vector.shape_cast %57 : vector<1x4x16xbf16> to vector<4x16xbf16>
    %59 = arith.extf %58 : vector<4x16xbf16> to vector<4x16xf32>
    %60 = arith.maximumf %56, %59 : vector<4x16xf32>
    %c0_30 = arith.constant 0 : index
    %c0_31 = arith.constant 0 : index
    %c224 = arith.constant 224 : index
    %61 = vector.load %arg2[%c0_30, %c0_31, %c224] : memref<1x4x256xbf16, #tpu.memory_space<vmem>>, vector<1x4x16xbf16>
    %62 = vector.shape_cast %61 : vector<1x4x16xbf16> to vector<4x16xbf16>
    %63 = arith.extf %62 : vector<4x16xbf16> to vector<4x16xf32>
    %64 = arith.maximumf %60, %63 : vector<4x16xf32>
    %c0_32 = arith.constant 0 : index
    %c0_33 = arith.constant 0 : index
    %c240 = arith.constant 240 : index
    %65 = vector.load %arg2[%c0_32, %c0_33, %c240] : memref<1x4x256xbf16, #tpu.memory_space<vmem>>, vector<1x4x16xbf16>
    %66 = vector.shape_cast %65 : vector<1x4x16xbf16> to vector<4x16xbf16>
    %67 = arith.extf %66 : vector<4x16xbf16> to vector<4x16xf32>
    %68 = arith.maximumf %64, %67 : vector<4x16xf32>
    %69 = vector.extract_strided_slice %68 {offsets = [0, 0], sizes = [4, 8], strides = [1, 1]} : vector<4x16xf32> to vector<4x8xf32>
    %cst_34 = arith.constant dense<0xFF800000> : vector<4xf32>
    %70 = vector.multi_reduction <maximumf>, %69, %cst_34 [1] : vector<4x8xf32> to vector<4xf32>
    %71 = vector.shape_cast %70 : vector<4xf32> to vector<4x1xf32>
    %72 = vector.extract_strided_slice %68 {offsets = [0, 8], sizes = [4, 8], strides = [1, 1]} : vector<4x16xf32> to vector<4x8xf32>
    %cst_35 = arith.constant dense<0xFF800000> : vector<4xf32>
    %73 = vector.multi_reduction <maximumf>, %72, %cst_35 [1] : vector<4x8xf32> to vector<4xf32>
    %74 = vector.shape_cast %73 : vector<4xf32> to vector<4x1xf32>
    %75 = tpu.concatenate %34, %37, %71, %74 in 1 : vector<4x1xf32>, vector<4x1xf32>, vector<4x1xf32>, vector<4x1xf32> -> vector<4x4xf32>
    %76 = arith.mulf %75, %75 : vector<4x4xf32>
    %cst_36 = arith.constant dense<0.000000e+00> : vector<4xf32>
    %77 = vector.multi_reduction <add>, %76, %cst_36 [0] : vector<4x4xf32> to vector<4xf32>
    %78 = vector.shape_cast %77 : vector<4xf32> to vector<1x4xf32>
    %79 = math.sqrt %78 : vector<1x4xf32>
    %cst_37 = arith.constant 9.99999993E-9 : f32
    %80 = vector.broadcast %cst_37 : f32 to vector<1x4xf32>
    %81 = arith.addf %79, %80 : vector<1x4xf32>
    %82 = vector.broadcast %81 : vector<1x4xf32> to vector<4x4xf32>
    %83 = arith.divf %75, %82 : vector<4x4xf32>
    %84 = vector.extract_strided_slice %83 {offsets = [0, 0], sizes = [4, 1], strides = [1, 1]} : vector<4x4xf32> to vector<4x1xf32>
    %85 = vector.broadcast %84 : vector<4x1xf32> to vector<4x4xf32>
    %86 = arith.mulf %83, %85 : vector<4x4xf32>
    %cst_38 = arith.constant dense<0.000000e+00> : vector<4xf32>
    %87 = vector.multi_reduction <add>, %86, %cst_38 [0] : vector<4x4xf32> to vector<4xf32>
    %88 = vector.shape_cast %87 : vector<4xf32> to vector<1x4xf32>
    %89 = vector.extract_strided_slice %83 {offsets = [0, 1], sizes = [4, 1], strides = [1, 1]} : vector<4x4xf32> to vector<4x1xf32>
    %90 = vector.broadcast %89 : vector<4x1xf32> to vector<4x4xf32>
    %91 = arith.mulf %83, %90 : vector<4x4xf32>
    %cst_39 = arith.constant dense<0.000000e+00> : vector<4xf32>
    %92 = vector.multi_reduction <add>, %91, %cst_39 [0] : vector<4x4xf32> to vector<4xf32>
    %93 = vector.shape_cast %92 : vector<4xf32> to vector<1x4xf32>
    %94 = vector.extract_strided_slice %83 {offsets = [0, 2], sizes = [4, 1], strides = [1, 1]} : vector<4x4xf32> to vector<4x1xf32>
    %95 = vector.broadcast %94 : vector<4x1xf32> to vector<4x4xf32>
    %96 = arith.mulf %83, %95 : vector<4x4xf32>
    %cst_40 = arith.constant dense<0.000000e+00> : vector<4xf32>
    %97 = vector.multi_reduction <add>, %96, %cst_40 [0] : vector<4x4xf32> to vector<4xf32>
    %98 = vector.shape_cast %97 : vector<4xf32> to vector<1x4xf32>
    %99 = vector.extract_strided_slice %83 {offsets = [0, 3], sizes = [4, 1], strides = [1, 1]} : vector<4x4xf32> to vector<4x1xf32>
    %100 = vector.broadcast %99 : vector<4x1xf32> to vector<4x4xf32>
    %101 = arith.mulf %83, %100 : vector<4x4xf32>
    %cst_41 = arith.constant dense<0.000000e+00> : vector<4xf32>
    %102 = vector.multi_reduction <add>, %101, %cst_41 [0] : vector<4x4xf32> to vector<4xf32>
    %103 = vector.shape_cast %102 : vector<4xf32> to vector<1x4xf32>
    %104 = tpu.concatenate %88, %93, %98, %103 in 0 : vector<1x4xf32>, vector<1x4xf32>, vector<1x4xf32>, vector<1x4xf32> -> vector<4x4xf32>
    %c0_42 = arith.constant 0 : index
    %c0_43 = arith.constant 0 : index
    %c0_44 = arith.constant 0 : index
    %105 = vector.load %arg1[%c0_42, %c0_43, %c0_44] : memref<1x4x256xbf16, #tpu.memory_space<vmem>>, vector<1x4x16xbf16>
    %106 = vector.shape_cast %105 : vector<1x4x16xbf16> to vector<4x16xbf16>
    %107 = arith.extf %106 : vector<4x16xbf16> to vector<4x16xf32>
    %c0_45 = arith.constant 0 : index
    %c0_46 = arith.constant 0 : index
    %c16_47 = arith.constant 16 : index
    %108 = vector.load %arg1[%c0_45, %c0_46, %c16_47] : memref<1x4x256xbf16, #tpu.memory_space<vmem>>, vector<1x4x16xbf16>
    %109 = vector.shape_cast %108 : vector<1x4x16xbf16> to vector<4x16xbf16>
    %110 = arith.extf %109 : vector<4x16xbf16> to vector<4x16xf32>
    %111 = arith.maximumf %107, %110 : vector<4x16xf32>
    %c0_48 = arith.constant 0 : index
    %c0_49 = arith.constant 0 : index
    %c32_50 = arith.constant 32 : index
    %112 = vector.load %arg1[%c0_48, %c0_49, %c32_50] : memref<1x4x256xbf16, #tpu.memory_space<vmem>>, vector<1x4x16xbf16>
    %113 = vector.shape_cast %112 : vector<1x4x16xbf16> to vector<4x16xbf16>
    %114 = arith.extf %113 : vector<4x16xbf16> to vector<4x16xf32>
    %115 = arith.maximumf %111, %114 : vector<4x16xf32>
    %c0_51 = arith.constant 0 : index
    %c0_52 = arith.constant 0 : index
    %c48_53 = arith.constant 48 : index
    %116 = vector.load %arg1[%c0_51, %c0_52, %c48_53] : memref<1x4x256xbf16, #tpu.memory_space<vmem>>, vector<1x4x16xbf16>
    %117 = vector.shape_cast %116 : vector<1x4x16xbf16> to vector<4x16xbf16>
    %118 = arith.extf %117 : vector<4x16xbf16> to vector<4x16xf32>
    %119 = arith.maximumf %115, %118 : vector<4x16xf32>
    %c0_54 = arith.constant 0 : index
    %c0_55 = arith.constant 0 : index
    %c64_56 = arith.constant 64 : index
    %120 = vector.load %arg1[%c0_54, %c0_55, %c64_56] : memref<1x4x256xbf16, #tpu.memory_space<vmem>>, vector<1x4x16xbf16>
    %121 = vector.shape_cast %120 : vector<1x4x16xbf16> to vector<4x16xbf16>
    %122 = arith.extf %121 : vector<4x16xbf16> to vector<4x16xf32>
    %123 = arith.maximumf %119, %122 : vector<4x16xf32>
    %c0_57 = arith.constant 0 : index
    %c0_58 = arith.constant 0 : index
    %c80_59 = arith.constant 80 : index
    %124 = vector.load %arg1[%c0_57, %c0_58, %c80_59] : memref<1x4x256xbf16, #tpu.memory_space<vmem>>, vector<1x4x16xbf16>
    %125 = vector.shape_cast %124 : vector<1x4x16xbf16> to vector<4x16xbf16>
    %126 = arith.extf %125 : vector<4x16xbf16> to vector<4x16xf32>
    %127 = arith.maximumf %123, %126 : vector<4x16xf32>
    %c0_60 = arith.constant 0 : index
    %c0_61 = arith.constant 0 : index
    %c96_62 = arith.constant 96 : index
    %128 = vector.load %arg1[%c0_60, %c0_61, %c96_62] : memref<1x4x256xbf16, #tpu.memory_space<vmem>>, vector<1x4x16xbf16>
    %129 = vector.shape_cast %128 : vector<1x4x16xbf16> to vector<4x16xbf16>
    %130 = arith.extf %129 : vector<4x16xbf16> to vector<4x16xf32>
    %131 = arith.maximumf %127, %130 : vector<4x16xf32>
    %c0_63 = arith.constant 0 : index
    %c0_64 = arith.constant 0 : index
    %c112_65 = arith.constant 112 : index
    %132 = vector.load %arg1[%c0_63, %c0_64, %c112_65] : memref<1x4x256xbf16, #tpu.memory_space<vmem>>, vector<1x4x16xbf16>
    %133 = vector.shape_cast %132 : vector<1x4x16xbf16> to vector<4x16xbf16>
    %134 = arith.extf %133 : vector<4x16xbf16> to vector<4x16xf32>
    %135 = arith.maximumf %131, %134 : vector<4x16xf32>
    %136 = vector.extract_strided_slice %135 {offsets = [0, 0], sizes = [4, 8], strides = [1, 1]} : vector<4x16xf32> to vector<4x8xf32>
    %cst_66 = arith.constant dense<0xFF800000> : vector<4xf32>
    %137 = vector.multi_reduction <maximumf>, %136, %cst_66 [1] : vector<4x8xf32> to vector<4xf32>
    %138 = vector.shape_cast %137 : vector<4xf32> to vector<4x1xf32>
    %139 = vector.extract_strided_slice %135 {offsets = [0, 8], sizes = [4, 8], strides = [1, 1]} : vector<4x16xf32> to vector<4x8xf32>
    %cst_67 = arith.constant dense<0xFF800000> : vector<4xf32>
    %140 = vector.multi_reduction <maximumf>, %139, %cst_67 [1] : vector<4x8xf32> to vector<4xf32>
    %141 = vector.shape_cast %140 : vector<4xf32> to vector<4x1xf32>
    %c0_68 = arith.constant 0 : index
    %c0_69 = arith.constant 0 : index
    %c128_70 = arith.constant 128 : index
    %142 = vector.load %arg1[%c0_68, %c0_69, %c128_70] : memref<1x4x256xbf16, #tpu.memory_space<vmem>>, vector<1x4x16xbf16>
    %143 = vector.shape_cast %142 : vector<1x4x16xbf16> to vector<4x16xbf16>
    %144 = arith.extf %143 : vector<4x16xbf16> to vector<4x16xf32>
    %c0_71 = arith.constant 0 : index
    %c0_72 = arith.constant 0 : index
    %c144_73 = arith.constant 144 : index
    %145 = vector.load %arg1[%c0_71, %c0_72, %c144_73] : memref<1x4x256xbf16, #tpu.memory_space<vmem>>, vector<1x4x16xbf16>
    %146 = vector.shape_cast %145 : vector<1x4x16xbf16> to vector<4x16xbf16>
    %147 = arith.extf %146 : vector<4x16xbf16> to vector<4x16xf32>
    %148 = arith.maximumf %144, %147 : vector<4x16xf32>
    %c0_74 = arith.constant 0 : index
    %c0_75 = arith.constant 0 : index
    %c160_76 = arith.constant 160 : index
    %149 = vector.load %arg1[%c0_74, %c0_75, %c160_76] : memref<1x4x256xbf16, #tpu.memory_space<vmem>>, vector<1x4x16xbf16>
    %150 = vector.shape_cast %149 : vector<1x4x16xbf16> to vector<4x16xbf16>
    %151 = arith.extf %150 : vector<4x16xbf16> to vector<4x16xf32>
    %152 = arith.maximumf %148, %151 : vector<4x16xf32>
    %c0_77 = arith.constant 0 : index
    %c0_78 = arith.constant 0 : index
    %c176_79 = arith.constant 176 : index
    %153 = vector.load %arg1[%c0_77, %c0_78, %c176_79] : memref<1x4x256xbf16, #tpu.memory_space<vmem>>, vector<1x4x16xbf16>
    %154 = vector.shape_cast %153 : vector<1x4x16xbf16> to vector<4x16xbf16>
    %155 = arith.extf %154 : vector<4x16xbf16> to vector<4x16xf32>
    %156 = arith.maximumf %152, %155 : vector<4x16xf32>
    %c0_80 = arith.constant 0 : index
    %c0_81 = arith.constant 0 : index
    %c192_82 = arith.constant 192 : index
    %157 = vector.load %arg1[%c0_80, %c0_81, %c192_82] : memref<1x4x256xbf16, #tpu.memory_space<vmem>>, vector<1x4x16xbf16>
    %158 = vector.shape_cast %157 : vector<1x4x16xbf16> to vector<4x16xbf16>
    %159 = arith.extf %158 : vector<4x16xbf16> to vector<4x16xf32>
    %160 = arith.maximumf %156, %159 : vector<4x16xf32>
    %c0_83 = arith.constant 0 : index
    %c0_84 = arith.constant 0 : index
    %c208_85 = arith.constant 208 : index
    %161 = vector.load %arg1[%c0_83, %c0_84, %c208_85] : memref<1x4x256xbf16, #tpu.memory_space<vmem>>, vector<1x4x16xbf16>
    %162 = vector.shape_cast %161 : vector<1x4x16xbf16> to vector<4x16xbf16>
    %163 = arith.extf %162 : vector<4x16xbf16> to vector<4x16xf32>
    %164 = arith.maximumf %160, %163 : vector<4x16xf32>
    %c0_86 = arith.constant 0 : index
    %c0_87 = arith.constant 0 : index
    %c224_88 = arith.constant 224 : index
    %165 = vector.load %arg1[%c0_86, %c0_87, %c224_88] : memref<1x4x256xbf16, #tpu.memory_space<vmem>>, vector<1x4x16xbf16>
    %166 = vector.shape_cast %165 : vector<1x4x16xbf16> to vector<4x16xbf16>
    %167 = arith.extf %166 : vector<4x16xbf16> to vector<4x16xf32>
    %168 = arith.maximumf %164, %167 : vector<4x16xf32>
    %c0_89 = arith.constant 0 : index
    %c0_90 = arith.constant 0 : index
    %c240_91 = arith.constant 240 : index
    %169 = vector.load %arg1[%c0_89, %c0_90, %c240_91] : memref<1x4x256xbf16, #tpu.memory_space<vmem>>, vector<1x4x16xbf16>
    %170 = vector.shape_cast %169 : vector<1x4x16xbf16> to vector<4x16xbf16>
    %171 = arith.extf %170 : vector<4x16xbf16> to vector<4x16xf32>
    %172 = arith.maximumf %168, %171 : vector<4x16xf32>
    %173 = vector.extract_strided_slice %172 {offsets = [0, 0], sizes = [4, 8], strides = [1, 1]} : vector<4x16xf32> to vector<4x8xf32>
    %cst_92 = arith.constant dense<0xFF800000> : vector<4xf32>
    %174 = vector.multi_reduction <maximumf>, %173, %cst_92 [1] : vector<4x8xf32> to vector<4xf32>
    %175 = vector.shape_cast %174 : vector<4xf32> to vector<4x1xf32>
    %176 = vector.extract_strided_slice %172 {offsets = [0, 8], sizes = [4, 8], strides = [1, 1]} : vector<4x16xf32> to vector<4x8xf32>
    %cst_93 = arith.constant dense<0xFF800000> : vector<4xf32>
    %177 = vector.multi_reduction <maximumf>, %176, %cst_93 [1] : vector<4x8xf32> to vector<4xf32>
    %178 = vector.shape_cast %177 : vector<4xf32> to vector<4x1xf32>
    %179 = tpu.concatenate %138, %141, %175, %178 in 1 : vector<4x1xf32>, vector<4x1xf32>, vector<4x1xf32>, vector<4x1xf32> -> vector<4x4xf32>
    %180 = arith.mulf %179, %179 : vector<4x4xf32>
    %cst_94 = arith.constant dense<0.000000e+00> : vector<4xf32>
    %181 = vector.multi_reduction <add>, %180, %cst_94 [0] : vector<4x4xf32> to vector<4xf32>
    %182 = vector.shape_cast %181 : vector<4xf32> to vector<1x4xf32>
    %183 = math.sqrt %182 : vector<1x4xf32>
    %cst_95 = arith.constant 9.99999993E-9 : f32
    %184 = vector.broadcast %cst_95 : f32 to vector<1x4xf32>
    %185 = arith.addf %183, %184 : vector<1x4xf32>
    %186 = vector.broadcast %185 : vector<1x4xf32> to vector<4x4xf32>
    %187 = arith.divf %179, %186 : vector<4x4xf32>
    %188 = vector.extract_strided_slice %187 {offsets = [0, 0], sizes = [4, 1], strides = [1, 1]} : vector<4x4xf32> to vector<4x1xf32>
    %189 = vector.broadcast %188 : vector<4x1xf32> to vector<4x4xf32>
    %190 = arith.mulf %187, %189 : vector<4x4xf32>
    %cst_96 = arith.constant dense<0.000000e+00> : vector<4xf32>
    %191 = vector.multi_reduction <add>, %190, %cst_96 [0] : vector<4x4xf32> to vector<4xf32>
    %192 = vector.shape_cast %191 : vector<4xf32> to vector<1x4xf32>
    %193 = vector.extract_strided_slice %187 {offsets = [0, 1], sizes = [4, 1], strides = [1, 1]} : vector<4x4xf32> to vector<4x1xf32>
    %194 = vector.broadcast %193 : vector<4x1xf32> to vector<4x4xf32>
    %195 = arith.mulf %187, %194 : vector<4x4xf32>
    %cst_97 = arith.constant dense<0.000000e+00> : vector<4xf32>
    %196 = vector.multi_reduction <add>, %195, %cst_97 [0] : vector<4x4xf32> to vector<4xf32>
    %197 = vector.shape_cast %196 : vector<4xf32> to vector<1x4xf32>
    %198 = vector.extract_strided_slice %187 {offsets = [0, 2], sizes = [4, 1], strides = [1, 1]} : vector<4x4xf32> to vector<4x1xf32>
    %199 = vector.broadcast %198 : vector<4x1xf32> to vector<4x4xf32>
    %200 = arith.mulf %187, %199 : vector<4x4xf32>
    %cst_98 = arith.constant dense<0.000000e+00> : vector<4xf32>
    %201 = vector.multi_reduction <add>, %200, %cst_98 [0] : vector<4x4xf32> to vector<4xf32>
    %202 = vector.shape_cast %201 : vector<4xf32> to vector<1x4xf32>
    %203 = vector.extract_strided_slice %187 {offsets = [0, 3], sizes = [4, 1], strides = [1, 1]} : vector<4x4xf32> to vector<4x1xf32>
    %204 = vector.broadcast %203 : vector<4x1xf32> to vector<4x4xf32>
    %205 = arith.mulf %187, %204 : vector<4x4xf32>
    %cst_99 = arith.constant dense<0.000000e+00> : vector<4xf32>
    %206 = vector.multi_reduction <add>, %205, %cst_99 [0] : vector<4x4xf32> to vector<4xf32>
    %207 = vector.shape_cast %206 : vector<4xf32> to vector<1x4xf32>
    %208 = tpu.concatenate %192, %197, %202, %207 in 0 : vector<1x4xf32>, vector<1x4xf32>, vector<1x4xf32>, vector<1x4xf32> -> vector<4x4xf32>
    %209 = arith.subf %104, %208 : vector<4x4xf32>
    %210 = arith.mulf %209, %209 : vector<4x4xf32>
    %211 = vector.shape_cast %210 : vector<4x4xf32> to vector<1x4x4xf32>
    %cst_100 = arith.constant dense<0.000000e+00> : vector<1xf32>
    %212 = vector.multi_reduction <add>, %211, %cst_100 [1, 2] : vector<1x4x4xf32> to vector<1xf32>
    %213 = vector.shape_cast %212 : vector<1xf32> to vector<1x1x1xf32>
    %214 = vector.extract %213[0, 0, 0] : f32 from vector<1x1x1xf32>
    %215 = vector.broadcast %214 : f32 to vector<1x1xf32>
    %216 = arith.addf %0, %215 : vector<1x1xf32>
    %217 = vector.shape_cast %216 : vector<1x1xf32> to vector<1x1xf32>
    %218 = vector.broadcast %217 : vector<1x1xf32> to vector<1x128xf32>
    %c0_101 = arith.constant 0 : index
    %c0_102 = arith.constant 0 : index
    %c0_103 = arith.constant 0 : index
    %219 = vector.load %arg3[%c0_101, %c0_102, %c0_103] : memref<1x1x128xf32, #tpu.memory_space<vmem>>, vector<1x1x128xf32>
    %220 = vector.shape_cast %219 : vector<1x1x128xf32> to vector<1x128xf32>
    %221 = vector.shape_cast %218 : vector<1x128xf32> to vector<1x1x128xf32>
    tpu.vector_store %arg3[%c0_101, %c0_102, %c0_103], %221 {strides = array<i32>} : memref<1x1x128xf32, #tpu.memory_space<vmem>>, vector<1x1x128xf32>,
    return
  }
  func.func @transform_0(%arg0: i32) -> (i32, i32, i32) {
    %c0_i32 = arith.constant 0 : i32
    %c0_i32_0 = arith.constant 0 : i32
    %c0_i32_1 = arith.constant 0 : i32
    return %arg0, %c0_i32, %c0_i32_0 : i32, i32, i32
  }
  func.func @transform_1(%arg0: i32) -> (i32, i32, i32) {
    %c0_i32 = arith.constant 0 : i32
    %c0_i32_0 = arith.constant 0 : i32
    %c0_i32_1 = arith.constant 0 : i32
    return %arg0, %c0_i32, %c0_i32_0 : i32, i32, i32
  }
  func.func @transform_2(%arg0: i32) -> (i32, i32, i32) {
    %c0_i32 = arith.constant 0 : i32
    %c0_i32_0 = arith.constant 0 : i32
    %c0_i32_1 = arith.constant 0 : i32
    return %arg0, %c0_i32, %c0_i32_0 : i32, i32, i32
  }
}

</mosaic_0001>

<llo_original>
// kernel: tpu_custom_call.1
$region0: #{tpu_custom_call.1}
  #allocation0 [shape = 'u32[]', space=smem, size = 0x4, offset = 0x4, fixed_abs, tag = 'smem constant byte address 0x4 - core index']
  #allocation1 [shape = 'u32[144,128]{1,0:T(1,128)}', space=vmem, size = 0x12000, scoped, tag = 'internal scratch']
  %s0 = inlined_call_operand.hbm [shape: bf16[2,4,256], index: 0, kind: input, shape index: {}]
  %s1 = inlined_call_operand.hbm [shape: bf16[2,4,256], index: 1, kind: input, shape index: {}]
  %s2 = inlined_call_operand.hbm [shape: f32[2,1,128], index: 2, kind: output, shape index: {}]
  %s3 = sld [smem:[#allocation0]]
  $region49: #{tpu_custom_call.1} parent=0
    _
  %s5 = ssub.s32 1, %s3
  %s6 = scalar_select 0, %s5, %s3
  $region1: #{tpu_custom_call.1} parent=0
    #allocation2 [shape = 'u8[4096]{0}', space=vmem, size = 0x1000, scoped, tag = 'input window, operand 0']
    #allocation3 [shape = 's32[2]{0}', space=sflag, size = 0x8, scoped, tag = 'scoped memory for tpu_custom_call.1']
    #allocation4 [shape = 's32[2]{0}', space=sflag, size = 0x8, scoped, tag = 'scoped memory for tpu_custom_call.1']
    #allocation5 [shape = 'u8[4096]{0}', space=vmem, size = 0x1000, scoped, tag = 'input window, operand 1']
    #allocation6 [shape = 's32[2]{0}', space=sflag, size = 0x8, scoped, tag = 'scoped memory for tpu_custom_call.1']
    #allocation7 [shape = 'u8[1024]{0}', space=vmem, size = 0x400, scoped, tag = 'output window, operand 0']
    %7 = vsyncpa [#allocation3], 0
    %s8 = scalar_lea.sflag [#allocation3], 1
    %9 = vsyncpa %s8, 0
    %10 = vsyncpa [#allocation6], 0
    %s11 = scalar_lea.sflag [#allocation6], 1
    %12 = vsyncpa %s11, 0
    %13 = vsyncpa [#allocation4], 0
    %s14 = scalar_lea.sflag [#allocation4], 1
    %15 = vsyncpa %s14, 0
    loop: start=0, step=1, limit=4
    $region2: #{tpu_custom_call.1} parent=1 // loop_pre_header
      _
    $region3: #{tpu_custom_call.1} parent=1 // loop_header
      %s17 = sphi 0, %s21
      %p18 = scmp.ge.s32.totalorder %s17, 4
      %s27 = sphi 0, %s29
      %s30 = sphi 0, %s27
      %s31 = sphi 0, %s30
      %s47 = sphi 0, %s31
      %s53 = sphi 0, %s55
      %s56 = sphi 0, %s53
      %s57 = sphi 0, %s56
      %s73 = sphi 0, %s57
      %s79 = sphi 0, %s81
      %s82 = sphi 0, %s79
      %s83 = sphi 0, %s82
      %s99 = sphi 0, %s83
    $region4: #{tpu_custom_call.1} parent=1 // loop_header_branch
      %20 = sbr.rel (%p18) target = $region8
    $region5: #{tpu_custom_call.1} parent=1 // loop_body
      %s22 = ssub.s32 %s17, 1
      %s23 = ssub.s32 %s17, 2
      %s24 = sadd.s32 %s17, 1
      %s25 = ssub.s32 %s17, %s24
      %p26 = scmp.eq.s32.totalorder %s25, 0
      %s28 = sadd.s32 %s27, 1
      %s29 = scalar_select %p26, %s27, %s28
      %p32 = pneg %p26
      %p33 = scmp.eq.s32.totalorder %s17, 1
      %p34 = por %p32, %p33
      %p35 = scmp.ne.s32.totalorder %s27, %s30
      %p36 = scmp.eq.s32.totalorder %s17, 0
      %p37 = por %p35, %p36
      %p38 = scmp.ne.s32.totalorder %s27, %s30
      %p39 = scmp.eq.s32.totalorder %s22, 1
      %p40 = por %p38, %p39
      %p41 = scmp.ne.s32.totalorder %s30, %s31
      %p42 = scmp.eq.s32.totalorder %s22, 0
      %p43 = por %p41, %p42
      %p44 = scmp.ne.s32.totalorder %s30, %s31
      %p45 = scmp.eq.s32.totalorder %s23, 1
      %p46 = por %p44, %p45
      %p48 = scmp.ne.s32.totalorder %s31, %s47
      %p49 = scmp.eq.s32.totalorder %s23, 0
      %p50 = por %p48, %p49
      %s51 = ssub.s32 %s17, %s24
      %p52 = scmp.eq.s32.totalorder %s51, 0
      %s54 = sadd.s32 %s53, 1
      %s55 = scalar_select %p52, %s53, %s54
      %p58 = pneg %p52
      %p59 = scmp.eq.s32.totalorder %s17, 1
      %p60 = por %p58, %p59
      %p61 = scmp.ne.s32.totalorder %s53, %s56
      %p62 = scmp.eq.s32.totalorder %s17, 0
      %p63 = por %p61, %p62
      %p64 = scmp.ne.s32.totalorder %s53, %s56
      %p65 = scmp.eq.s32.totalorder %s22, 1
      %p66 = por %p64, %p65
      %p67 = scmp.ne.s32.totalorder %s56, %s57
      %p68 = scmp.eq.s32.totalorder %s22, 0
      %p69 = por %p67, %p68
      %p70 = scmp.ne.s32.totalorder %s56, %s57
      %p71 = scmp.eq.s32.totalorder %s23, 1
      %p72 = por %p70, %p71
      %p74 = scmp.ne.s32.totalorder %s57, %s73
      %p75 = scmp.eq.s32.totalorder %s23, 0
      %p76 = por %p74, %p75
      %s77 = ssub.s32 %s17, %s24
      %p78 = scmp.eq.s32.totalorder %s77, 0
      %s80 = sadd.s32 %s79, 1
      %s81 = scalar_select %p78, %s79, %s80
      %p84 = pneg %p78
      %p85 = scmp.eq.s32.totalorder %s17, 1
      %p86 = por %p84, %p85
      %p87 = scmp.ne.s32.totalorder %s79, %s82
      %p88 = scmp.eq.s32.totalorder %s17, 0
      %p89 = por %p87, %p88
      %p90 = scmp.ne.s32.totalorder %s79, %s82
      %p91 = scmp.eq.s32.totalorder %s22, 1
      %p92 = por %p90, %p91
      %p93 = scmp.ne.s32.totalorder %s82, %s83
      %p94 = scmp.eq.s32.totalorder %s22, 0
      %p95 = por %p93, %p94
      %p96 = scmp.ne.s32.totalorder %s82, %s83
      %p97 = scmp.eq.s32.totalorder %s23, 1
      %p98 = por %p96, %p97
      %p100 = scmp.ne.s32.totalorder %s83, %s99
      %p101 = scmp.eq.s32.totalorder %s23, 0
      %p102 = por %p100, %p101
      %p103 = scmp.le.s32.totalorder 1, %s17
      %p104 = scmp.lt.s32.totalorder %s17, 3
      %p105 = pnand %p103, %p104
      %p106 = pneg %p105
      // Predicated region
      $region9: #{tpu_custom_call.1} parent=5 // pred_check
        _
      $region10: #{tpu_custom_call.1} parent=5 // pred_check_branch
        %108 = sbr.rel (%p105) target = $region12
      $region11: #{tpu_custom_call.1} parent=5 // pred_region
        %s109 = ssub.s32 %s17, 1
      $region12: #{tpu_custom_call.1} parent=5 // pred_fallthru
        _
      %p110 = scmp.lt.s32.totalorder %s17, 2
      // Predicated region
      $region13: #{tpu_custom_call.1} parent=5 // pred_check
        %p111 = pneg %p110
      $region14: #{tpu_custom_call.1} parent=5 // pred_check_branch
        %113 = sbr.rel (%p111) target = $region16
      $region15: #{tpu_custom_call.1} parent=5 // pred_region
        // Predicated region
        $region17: #{tpu_custom_call.1} parent=15 // pred_check
          %p114 = pneg %p37
        $region18: #{tpu_custom_call.1} parent=15 // pred_check_branch
          %116 = sbr.rel (%p114) target = $region20
        $region19: #{tpu_custom_call.1} parent=15 // pred_region
          %s117 = sand.u32 %s27, 1
          %s118 = scalar_lea.sflag [#allocation3], %s117
          %s119 = sand.u32 %s27, 1
          %s120 = smul.addr %s119, 4
          %s121 = scalar_lea.vmem [#allocation2], %s120
          %s123 = ssub.s32 64, 64
          %124 = vsyncadd %s118, %s123
          %s125 = smul.addr %s17, 2
          %s126 = smul.addr %s125, 32
          %s127 = scalar_lea.hbm %s0, %s126
          %s129 = sshll.u32 %s121, 4
          %s130 = int_to_ptr.vmem [resolvable:$true] %s129
          %132 = dma.hbm_to_vmem [thread:$0]  %s127, 64, %s130, %s118
        $region20: #{tpu_custom_call.1} parent=15 // pred_fallthru
          _
        // Predicated region
        $region21: #{tpu_custom_call.1} parent=15 // pred_check
          %p133 = pneg %p63
        $region22: #{tpu_custom_call.1} parent=15 // pred_check_branch
          %135 = sbr.rel (%p133) target = $region24
        $region23: #{tpu_custom_call.1} parent=15 // pred_region
          %s136 = sand.u32 %s53, 1
          %s137 = scalar_lea.sflag [#allocation6], %s136
          %s138 = sand.u32 %s53, 1
          %s139 = smul.addr %s138, 4
          %s140 = scalar_lea.vmem [#allocation5], %s139
          %s142 = ssub.s32 64, 64
          %143 = vsyncadd %s137, %s142
          %s144 = smul.addr %s17, 2
          %s145 = smul.addr %s144, 32
          %s146 = scalar_lea.hbm %s1, %s145
          %s148 = sshll.u32 %s140, 4
          %s149 = int_to_ptr.vmem [resolvable:$true] %s148
          %151 = dma.hbm_to_vmem [thread:$0]  %s146, 64, %s149, %s137
        $region24: #{tpu_custom_call.1} parent=15 // pred_fallthru
          _
      $region16: #{tpu_custom_call.1} parent=5 // pred_fallthru
        _
      %p152 = scmp.le.s32.totalorder 1, %s17
      %p153 = scmp.lt.s32.totalorder %s17, 3
      %p154 = pnand %p152, %p153
      %p155 = pneg %p154
      // Predicated region
      $region25: #{tpu_custom_call.1} parent=5 // pred_check
        _
      $region26: #{tpu_custom_call.1} parent=5 // pred_check_branch
        %157 = sbr.rel (%p154) target = $region28
      $region27: #{tpu_custom_call.1} parent=5 // pred_region
        %s158 = ssub.s32 %s17, 1
        %s159 = sand.u32 %s30, 1
        %s160 = scalar_lea.sflag [#allocation3], %s159
        %s161 = sand.u32 %s30, 1
        %s162 = smul.addr %s161, 4
        %s163 = scalar_lea.vmem [#allocation2], %s162
        // Predicated region
        $region29: #{tpu_custom_call.1} parent=27 // pred_check
          %p164 = pneg %p43
        $region30: #{tpu_custom_call.1} parent=27 // pred_check_branch
          %166 = sbr.rel (%p164) target = $region32
        $region31: #{tpu_custom_call.1} parent=27 // pred_region
          %167 = dma.done %s160, 64
        $region32: #{tpu_custom_call.1} parent=27 // pred_fallthru
          _
        %s168 = sand.u32 %s56, 1
        %s169 = scalar_lea.sflag [#allocation6], %s168
        %s170 = sand.u32 %s56, 1
        %s171 = smul.addr %s170, 4
        %s172 = scalar_lea.vmem [#allocation5], %s171
        // Predicated region
        $region33: #{tpu_custom_call.1} parent=27 // pred_check
          %p173 = pneg %p69
        $region34: #{tpu_custom_call.1} parent=27 // pred_check_branch
          %175 = sbr.rel (%p173) target = $region36
        $region35: #{tpu_custom_call.1} parent=27 // pred_region
          %176 = dma.done %s169, 64
        $region36: #{tpu_custom_call.1} parent=27 // pred_fallthru
          _
        %s177 = sand.u32 %s30, 1
        %s178 = scalar_lea.sflag [#allocation3], %s177
        %s179 = sand.u32 %s30, 1
        %s180 = smul.addr %s179, 4
        %s181 = scalar_lea.vmem [#allocation2], %s180
        %p182 = pneg %p43
        %p183 = pneg %p40
        %s184 = sand.u32 %s56, 1
        %s185 = scalar_lea.sflag [#allocation6], %s184
        %s186 = sand.u32 %s56, 1
        %s187 = smul.addr %s186, 4
        %s188 = scalar_lea.vmem [#allocation5], %s187
        %p189 = pneg %p69
        %p190 = pneg %p66
        %p191 = pneg %p95
        %p192 = pneg %p92
        %s193 = sand.u32 %s82, 1
        %s194 = scalar_lea.sflag [#allocation4], %s193
        %s195 = sand.u32 %s82, 1
        %s196 = scalar_lea.vmem [#allocation7], %s195
        %v197 = vld [vmem:[%s172] sm:$0x3]
        %v198 = vunpack.c.l.bf16 %v197
        %200 = vrot.lane.b32.xlu0 %v198, 112
        %v201 = vpop.permute.xlu0 %200
        %v203 = vmax.f32 %v198, %v201
        %204 = vrot.lane.b32.xlu0 %v198, 96
        %v205 = vpop.permute.xlu0 %204
        %v207 = vmax.f32 %v203, %v205
        %208 = vrot.lane.b32.xlu0 %v198, 80
        %v209 = vpop.permute.xlu0 %208
        %v211 = vmax.f32 %v207, %v209
        %212 = vrot.lane.b32.xlu0 %v198, 64
        %v213 = vpop.permute.xlu0 %212
        %v215 = vmax.f32 %v211, %v213
        %216 = vrot.lane.b32.xlu0 %v198, 48
        %v217 = vpop.permute.xlu0 %216
        %v219 = vmax.f32 %v215, %v217
        %220 = vrot.lane.b32.xlu0 %v198, 32
        %v221 = vpop.permute.xlu0 %220
        %v223 = vmax.f32 %v219, %v221
        %224 = vrot.lane.b32.xlu0 %v198, 16
        %v225 = vpop.permute.xlu0 %224
        %v227 = vmax.f32 %v223, %v225
        %vm228 = vcmask 60416
        %v229 = vsel %vm228, %v227, -inf
        %230 = vmax.xlane.f32.xlu0 %v229
        %v231 = vpop.xlane.xlu0 %230
        %vm232 = vcmask 126016
        %v233 = vsel %vm232, %v227, -inf
        %234 = vmax.xlane.f32.xlu0 %v233
        %v235 = vpop.xlane.xlu0 %234
        %v236 = vld [vmem:[%s172 + $0x2] sm:$0x3]
        %v237 = vunpack.c.l.bf16 %v236
        %239 = vrot.lane.b32.xlu0 %v237, 112
        %v240 = vpop.permute.xlu0 %239
        %v242 = vmax.f32 %v237, %v240
        %243 = vrot.lane.b32.xlu0 %v237, 96
        %v244 = vpop.permute.xlu0 %243
        %v246 = vmax.f32 %v242, %v244
        %247 = vrot.lane.b32.xlu0 %v237, 80
        %v248 = vpop.permute.xlu0 %247
        %v250 = vmax.f32 %v246, %v248
        %251 = vrot.lane.b32.xlu0 %v237, 64
        %v252 = vpop.permute.xlu0 %251
        %v254 = vmax.f32 %v250, %v252
        %255 = vrot.lane.b32.xlu0 %v237, 48
        %v256 = vpop.permute.xlu0 %255
        %v258 = vmax.f32 %v254, %v256
        %259 = vrot.lane.b32.xlu0 %v237, 32
        %v260 = vpop.permute.xlu0 %259
        %v262 = vmax.f32 %v258, %v260
        %263 = vrot.lane.b32.xlu0 %v237, 16
        %v264 = vpop.permute.xlu0 %263
        %v266 = vmax.f32 %v262, %v264
        %v267 = vsel %vm228, %v266, -inf
        %268 = vmax.xlane.f32.xlu0 %v267
        %v269 = vpop.xlane.xlu0 %268
        %v270 = vsel %vm232, %v266, -inf
        %271 = vmax.xlane.f32.xlu0 %v270
        %v272 = vpop.xlane.xlu0 %271
        %vm273 = vcmask 7168
        %v274 = vsel %vm273, %v231, %v235
        %vm275 = vcmask 15360
        %v276 = vsel %vm275, %v274, %v269
        %vm277 = vcmask 23552
        %v278 = vsel %vm277, %v276, %v272
        %v279 = vmul.f32 %v278, %v278
        %vm280 = vcmask 27648
        %v281 = vsel %vm280, %v279, 0.0
        %v282 = vrot.slane %v281, 4
        %v283 = vadd.f32 %v281, %v282
        %v284 = vrot.slane %v283, 2
        %v285 = vadd.f32 %v283, %v284
        %v286 = vrot.slane %v285, 1
        %v287 = vadd.f32 %v285, %v286
        %v288 = vrsqrt.pop %v287
        %v289 = vmul.f32 %v287, %v288
        %vm290 = vcmp.eq.f32.partialorder %v287, inf
        %v291 = vsel %vm290, %v287, %v289
        %vm292 = vcmp.eq.f32.partialorder %v287, 0.0
        %v293 = vand.u32 %v287, 2147483648
        %v294 = vsel %vm292, %v293, %v291
        %v295 = vadd.f32 %v294, 1e-08
        %v296 = vrcp.pop %v295
        %v297 = vmul.f32 %v278, %v296
        %299 = vset.pattern.permute.xlu0 0
        %300 = vperm.xlu0 %299, %v297
        %v301 = vpop.permute.xlu0 %300
        %v303 = vmul.f32 %v297, %v301
        %v304 = vsel %vm280, %v303, 0.0
        %v305 = vrot.slane %v304, 4
        %v306 = vadd.f32 %v304, %v305
        %v307 = vrot.slane %v306, 2
        %v308 = vadd.f32 %v306, %v307
        %v309 = vrot.slane %v308, 1
        %v310 = vadd.f32 %v308, %v309
        %311 = vset.pattern.permute.xlu0 1
        %312 = vperm.xlu0 %311, %v297
        %v313 = vpop.permute.xlu0 %312
        %v315 = vmul.f32 %v297, %v313
        %v316 = vsel %vm280, %v315, 0.0
        %v317 = vrot.slane %v316, 4
        %v318 = vadd.f32 %v316, %v317
        %v319 = vrot.slane %v318, 2
        %v320 = vadd.f32 %v318, %v319
        %v321 = vrot.slane %v320, 1
        %v322 = vadd.f32 %v320, %v321
        %323 = vset.pattern.permute.xlu0 2
        %324 = vperm.xlu0 %323, %v297
        %v325 = vpop.permute.xlu0 %324
        %v327 = vmul.f32 %v297, %v325
        %v328 = vsel %vm280, %v327, 0.0
        %v329 = vrot.slane %v328, 4
        %v330 = vadd.f32 %v328, %v329
        %v331 = vrot.slane %v330, 2
        %v332 = vadd.f32 %v330, %v331
        %v333 = vrot.slane %v332, 1
        %v334 = vadd.f32 %v332, %v333
        %335 = vset.pattern.permute.xlu0 3
        %336 = vperm.xlu0 %335, %v297
        %v337 = vpop.permute.xlu0 %336
        %v339 = vmul.f32 %v297, %v337
        %v340 = vsel %vm280, %v339, 0.0
        %v341 = vrot.slane %v340, 4
        %v342 = vadd.f32 %v340, %v341
        %v343 = vrot.slane %v342, 2
        %v344 = vadd.f32 %v342, %v343
        %v345 = vrot.slane %v344, 1
        %v346 = vadd.f32 %v344, %v345
        %vm347 = vcmask 1040384
        %v348 = vsel %vm347, %v310, %v322
        %vm349 = vcmask 1041408
        %v350 = vsel %vm349, %v348, %v334
        %vm351 = vcmask 1042432
        %v352 = vsel %vm351, %v350, %v346
        %v353 = vld [vmem:[%s163] sm:$0x3]
        %v354 = vunpack.c.l.bf16 %v353
        %356 = vrot.lane.b32.xlu0 %v354, 112
        %v357 = vpop.permute.xlu0 %356
        %v359 = vmax.f32 %v354, %v357
        %360 = vrot.lane.b32.xlu0 %v354, 96
        %v361 = vpop.permute.xlu0 %360
        %v363 = vmax.f32 %v359, %v361
        %364 = vrot.lane.b32.xlu0 %v354, 80
        %v365 = vpop.permute.xlu0 %364
        %v367 = vmax.f32 %v363, %v365
        %368 = vrot.lane.b32.xlu0 %v354, 64
        %v369 = vpop.permute.xlu0 %368
        %v371 = vmax.f32 %v367, %v369
        %372 = vrot.lane.b32.xlu0 %v354, 48
        %v373 = vpop.permute.xlu0 %372
        %v375 = vmax.f32 %v371, %v373
        %376 = vrot.lane.b32.xlu0 %v354, 32
        %v377 = vpop.permute.xlu0 %376
        %v379 = vmax.f32 %v375, %v377
        %380 = vrot.lane.b32.xlu0 %v354, 16
        %v381 = vpop.permute.xlu0 %380
        %v383 = vmax.f32 %v379, %v381
        %v384 = vsel %vm228, %v383, -inf
        %385 = vmax.xlane.f32.xlu0 %v384
        %v386 = vpop.xlane.xlu0 %385
        %v387 = vsel %vm232, %v383, -inf
        %388 = vmax.xlane.f32.xlu0 %v387
        %v389 = vpop.xlane.xlu0 %388
        %v390 = vld [vmem:[%s163 + $0x2] sm:$0x3]
        %v391 = vunpack.c.l.bf16 %v390
        %393 = vrot.lane.b32.xlu0 %v391, 112
        %v394 = vpop.permute.xlu0 %393
        %v396 = vmax.f32 %v391, %v394
        %397 = vrot.lane.b32.xlu0 %v391, 96
        %v398 = vpop.permute.xlu0 %397
        %v400 = vmax.f32 %v396, %v398
        %401 = vrot.lane.b32.xlu0 %v391, 80
        %v402 = vpop.permute.xlu0 %401
        %v404 = vmax.f32 %v400, %v402
        %405 = vrot.lane.b32.xlu0 %v391, 64
        %v406 = vpop.permute.xlu0 %405
        %v408 = vmax.f32 %v404, %v406
        %409 = vrot.lane.b32.xlu0 %v391, 48
        %v410 = vpop.permute.xlu0 %409
        %v412 = vmax.f32 %v408, %v410
        %413 = vrot.lane.b32.xlu0 %v391, 32
        %v414 = vpop.permute.xlu0 %413
        %v416 = vmax.f32 %v412, %v414
        %417 = vrot.lane.b32.xlu0 %v391, 16
        %v418 = vpop.permute.xlu0 %417
        %v420 = vmax.f32 %v416, %v418
        %v421 = vsel %vm228, %v420, -inf
        %422 = vmax.xlane.f32.xlu0 %v421
        %v423 = vpop.xlane.xlu0 %422
        %v424 = vsel %vm232, %v420, -inf
        %425 = vmax.xlane.f32.xlu0 %v424
        %v426 = vpop.xlane.xlu0 %425
        %v427 = vsel %vm273, %v386, %v389
        %v428 = vsel %vm275, %v427, %v423
        %v429 = vsel %vm277, %v428, %v426
        %v430 = vmul.f32 %v429, %v429
        %v431 = vsel %vm280, %v430, 0.0
        %v432 = vrot.slane %v431, 4
        %v433 = vadd.f32 %v431, %v432
        %v434 = vrot.slane %v433, 2
        %v435 = vadd.f32 %v433, %v434
        %v436 = vrot.slane %v435, 1
        %v437 = vadd.f32 %v435, %v436
        %v438 = vrsqrt.pop %v437
        %v439 = vmul.f32 %v437, %v438
        %vm440 = vcmp.eq.f32.partialorder %v437, inf
        %v441 = vsel %vm440, %v437, %v439
        %vm442 = vcmp.eq.f32.partialorder %v437, 0.0
        %v443 = vand.u32 %v437, 2147483648
        %v444 = vsel %vm442, %v443, %v441
        %v445 = vadd.f32 %v444, 1e-08
        %v446 = vrcp.pop %v445
        %v447 = vmul.f32 %v429, %v446
        %449 = vset.pattern.permute.xlu0 0
        %450 = vperm.xlu0 %449, %v447
        %v451 = vpop.permute.xlu0 %450
        %v453 = vmul.f32 %v447, %v451
        %v454 = vsel %vm280, %v453, 0.0
        %v455 = vrot.slane %v454, 4
        %v456 = vadd.f32 %v454, %v455
        %v457 = vrot.slane %v456, 2
        %v458 = vadd.f32 %v456, %v457
        %v459 = vrot.slane %v458, 1
        %v460 = vadd.f32 %v458, %v459
        %461 = vset.pattern.permute.xlu0 1
        %462 = vperm.xlu0 %461, %v447
        %v463 = vpop.permute.xlu0 %462
        %v465 = vmul.f32 %v447, %v463
        %v466 = vsel %vm280, %v465, 0.0
        %v467 = vrot.slane %v466, 4
        %v468 = vadd.f32 %v466, %v467
        %v469 = vrot.slane %v468, 2
        %v470 = vadd.f32 %v468, %v469
        %v471 = vrot.slane %v470, 1
        %v472 = vadd.f32 %v470, %v471
        %473 = vset.pattern.permute.xlu0 2
        %474 = vperm.xlu0 %473, %v447
        %v475 = vpop.permute.xlu0 %474
        %v477 = vmul.f32 %v447, %v475
        %v478 = vsel %vm280, %v477, 0.0
        %v479 = vrot.slane %v478, 4
        %v480 = vadd.f32 %v478, %v479
        %v481 = vrot.slane %v480, 2
        %v482 = vadd.f32 %v480, %v481
        %v483 = vrot.slane %v482, 1
        %v484 = vadd.f32 %v482, %v483
        %485 = vset.pattern.permute.xlu0 3
        %486 = vperm.xlu0 %485, %v447
        %v487 = vpop.permute.xlu0 %486
        %v489 = vmul.f32 %v447, %v487
        %v490 = vsel %vm280, %v489, 0.0
        %v491 = vrot.slane %v490, 4
        %v492 = vadd.f32 %v490, %v491
        %v493 = vrot.slane %v492, 2
        %v494 = vadd.f32 %v492, %v493
        %v495 = vrot.slane %v494, 1
        %v496 = vadd.f32 %v494, %v495
        %v497 = vsel %vm347, %v460, %v472
        %v498 = vsel %vm349, %v497, %v484
        %v499 = vsel %vm351, %v498, %v496
        %v500 = vsub.f32 %v352, %v499
        %v501 = vmul.f32 %v500, %v500
        %v502 = vsel %vm280, %v501, 0.0
        %503 = vadd.xlane.f32.xlu0 %v502
        %v504 = vpop.xlane.xlu0 %503
        %v505 = vrot.slane %v504, 4
        %v506 = vadd.f32 %v504, %v505
        %v507 = vrot.slane %v506, 2
        %v508 = vadd.f32 %v506, %v507
        %v509 = vrot.slane %v508, 1
        %v510 = vadd.f32 %v508, %v509
        %s511 = vtos %v510
        %v512 = vstv %s511
        %v513 = vadd.f32 %v512, 0.0
        %514 = vst [vmem:[%s196] sm:$0x1] %v513
        %s515 = sand.u32 %s82, 1
        %s516 = scalar_lea.sflag [#allocation4], %s515
        %s517 = sand.u32 %s82, 1
        %s518 = scalar_lea.vmem [#allocation7], %s517
        // Predicated region
        $region37: #{tpu_custom_call.1} parent=27 // pred_check
          %p519 = pneg %p92
        $region38: #{tpu_custom_call.1} parent=27 // pred_check_branch
          %521 = sbr.rel (%p519) target = $region40
        $region39: #{tpu_custom_call.1} parent=27 // pred_region
          %s523 = ssub.s32 16, 16
          %524 = vsyncadd %s516, %s523
          %s525 = smul.addr %s22, 16
          %s526 = scalar_lea.hbm %s2, %s525
          %s528 = sshll.u32 %s518, 4
          %s529 = int_to_ptr.vmem [resolvable:$true] %s528
          %531 = dma.vmem_to_hbm [thread:$0]  %s529, 16, %s526, %s516
        $region40: #{tpu_custom_call.1} parent=27 // pred_fallthru
          _
      $region28: #{tpu_custom_call.1} parent=5 // pred_fallthru
        _
      %p532 = scmp.le.s32.totalorder 2, %s17
      // Predicated region
      $region41: #{tpu_custom_call.1} parent=5 // pred_check
        %p533 = pneg %p532
      $region42: #{tpu_custom_call.1} parent=5 // pred_check_branch
        %535 = sbr.rel (%p533) target = $region44
      $region43: #{tpu_custom_call.1} parent=5 // pred_region
        %s536 = ssub.s32 %s17, 2
        // Predicated region
        $region45: #{tpu_custom_call.1} parent=43 // pred_check
          %p537 = pneg %p98
        $region46: #{tpu_custom_call.1} parent=43 // pred_check_branch
          %539 = sbr.rel (%p537) target = $region48
        $region47: #{tpu_custom_call.1} parent=43 // pred_region
          %s540 = sand.u32 %s83, 1
          %s541 = scalar_lea.sflag [#allocation4], %s540
          %s542 = sand.u32 %s83, 1
          %s543 = scalar_lea.vmem [#allocation7], %s542
          %544 = dma.done %s541, 16
        $region48: #{tpu_custom_call.1} parent=43 // pred_fallthru
          _
      $region44: #{tpu_custom_call.1} parent=5 // pred_fallthru
        _
    $region6: #{tpu_custom_call.1} parent=1 // loop_footer
      %s21 = sadd.s32 1, %s17
    $region7: #{tpu_custom_call.1} parent=1 // loop_footer_branch
      %16 = sbr.rel target = $region3
    $region8: #{tpu_custom_call.1} parent=1 // loop_exit
      _
    %545 = vsyncpa [#allocation3], 1
    %s546 = scalar_lea.sflag [#allocation3], 1
    %547 = vsyncpa %s546, 1
    %548 = vsyncpa [#allocation6], 1
    %s549 = scalar_lea.sflag [#allocation6], 1
    %550 = vsyncpa %s549, 1
    %551 = vsyncpa [#allocation4], 1
    %s552 = scalar_lea.sflag [#allocation4], 1
    %553 = vsyncpa %s552, 1

</llo_original>
